<compile_context>
chip_gen: v7x
topology: tpu7x:2x2x1
jax: 0.10.0
libtpu: 0.0.40
codegen_flags: <defaults>
</compile_context>

<pallas_src>
import jax
import jax.numpy as jnp
from jax.experimental import pallas as pl
from jax.experimental.pallas import tpu as pltpu

HIDDEN = 32


def mlp_kernel(x_ref, w1_ref, wh_ref, w5_ref, b_ref, o_ref):
    # x_ref: (2, TILE_N)  w1_ref: (32, 2)  wh_ref: (3, 32, 32)
    # w5_ref: (1, 32)     b_ref: (32, 5)   o_ref: (1, TILE_N)
    x = x_ref[...]
    h = jnp.tanh(
        jnp.dot(w1_ref[...], x, preferred_element_type=jnp.float32)
        + b_ref[:, 0:1])                                        # (32, TILE_N)
    for k in range(3):  # static unroll over the 3 hidden layers
        h = jnp.tanh(
            jnp.dot(wh_ref[k], h, preferred_element_type=jnp.float32)
            + b_ref[:, k + 1:k + 2])                            # (32, TILE_N)
    out = (jnp.dot(w5_ref[...], h, preferred_element_type=jnp.float32)
           + b_ref[0:1, 4:5])                                   # (1, TILE_N)
    o_ref[...] = out.astype(o_ref.dtype)


def mlp_forward(x, params, tile_n=2048):
    """x: (N, 2) float32 (any N). Returns (N, 1) float32."""
    N, in_dim = x.shape
    assert in_dim == 2
    (w1, b1), (w2, b2), (w3, b3), (w4, b4), (w5, b5) = params

    # Pack parameters: 10 arrays -> 4 pipelined inputs.
    wh = jnp.stack([w2, w3, w4], axis=0)                        # (3, 32, 32)
    b_all = jnp.zeros((HIDDEN, 5), jnp.float32)
    b_all = (b_all.at[:, 0].set(b1).at[:, 1].set(b2)
                  .at[:, 2].set(b3).at[:, 3].set(b4).at[0, 4].set(b5[0]))

    # Batch on the lane axis; pad N up to a multiple of the (128-aligned) tile.
    n_round = ((N + 127) // 128) * 128
    tile_n = min(tile_n, n_round)                # shrink tile for small batches
    n_pad = pl.cdiv(n_round, tile_n) * tile_n
    x_t = jnp.pad(x.T, ((0, 0), (0, n_pad - N)))                # (2, n_pad)

    grid = (n_pad // tile_n,)

    cost = pl.CostEstimate(
        flops=2 * N * (in_dim * HIDDEN + 3 * HIDDEN * HIDDEN + HIDDEN),
        transcendentals=4 * N * HIDDEN,
        bytes_accessed=int((x_t.size + n_pad
                            + w1.size + wh.size + w5.size + b_all.size) * 4),
    )

    out_t = pl.pallas_call(
        mlp_kernel,
        out_shape=jax.ShapeDtypeStruct((1, n_pad), jnp.float32),
        grid_spec=pltpu.PrefetchScalarGridSpec(
            num_scalar_prefetch=0,
            grid=grid,
            in_specs=[
                pl.BlockSpec((2, tile_n), lambda i: (0, i)),    # x^T tile
                pl.BlockSpec(w1.shape, lambda i: (0, 0)),       # (32, 2)
                pl.BlockSpec(wh.shape, lambda i: (0, 0, 0)),    # (3, 32, 32)
                pl.BlockSpec(w5.shape, lambda i: (0, 0)),       # (1, 32)
                pl.BlockSpec(b_all.shape, lambda i: (0, 0)),    # (32, 5)
            ],
            out_specs=pl.BlockSpec((1, tile_n), lambda i: (0, i)),
        ),
        compiler_params=pltpu.CompilerParams(
            dimension_semantics=("parallel",)),
        cost_estimate=cost,
    )(x_t, w1, wh, w5, b_all)

    # Layout plumbing back to the (N, 1) torch output shape.
    return out_t.reshape(n_pad)[:N].reshape(N, 1)


def init_params(key):
    """Torch-native layout: W is (out, in), b is (out,), U(-1/sqrt(fan_in), +)."""
    dims = [(2, HIDDEN), (HIDDEN, HIDDEN), (HIDDEN, HIDDEN),
            (HIDDEN, HIDDEN), (HIDDEN, 1)]
    params = []
    for (fan_in, fan_out) in dims:
        key, kw, kb = jax.random.split(key, 3)
        bound = 1.0 / jnp.sqrt(jnp.float32(fan_in))
        w = jax.random.uniform(kw, (fan_out, fan_in), jnp.float32,
                               minval=-bound, maxval=bound)
        b = jax.random.uniform(kb, (fan_out,), jnp.float32,
                               minval=-bound, maxval=bound)
        params.append((w, b))
    return params


def reference_forward(x, params):
    h = x
    for i, (w, b) in enumerate(params):
        h = h @ w.T + b
        if i < len(params) - 1:
            h = jnp.tanh(h)
    return h


if __name__ == "__main__":
    key = jax.random.PRNGKey(0)
    key, kx1, kx2 = jax.random.split(key, 3)
    params = init_params(key)

    # 256 (x, t) collocation points for the 2D PDE interpolation problem.
    N = 256
    x = jax.random.normal(kx1, (N, 2), jnp.float32)
    out = mlp_forward(x, params)
    jax.block_until_ready(out)
    ref = reference_forward(x, params)
    assert out.shape == (N, 1)
    assert jnp.allclose(out, ref, atol=1e-5, rtol=1e-5)

    # Ragged batch (exercises the padding path).
    N2 = 200
    x2 = jax.random.normal(kx2, (N2, 2), jnp.float32)
    out2 = mlp_forward(x2, params)
    jax.block_until_ready(out2)
    ref2 = reference_forward(x2, params)
    assert out2.shape == (N2, 1)
    assert jnp.allclose(out2, ref2, atol=1e-5, rtol=1e-5)

    print("KERNEL_OK")
</pallas_src>

<mosaic_0001>
module attributes {stable_mosaic.version = 11 : i64} {
  func.func @mlp_kernel(%arg0: i32, %arg1: memref<2x256xf32, #tpu.memory_space<vmem>>, %arg2: memref<32x2xf32, #tpu.memory_space<vmem>>, %arg3: memref<3x32x32xf32, #tpu.memory_space<vmem>>, %arg4: memref<1x32xf32, #tpu.memory_space<vmem>>, %arg5: memref<32x5xf32, #tpu.memory_space<vmem>>, %arg6: memref<1x256xf32, #tpu.memory_space<vmem>>) attributes {dimension_semantics = [#tpu.dimension_semantics<parallel>], iteration_bounds = array<i64: 1>, scalar_prefetch = 0 : i64, scratch_operands = 0 : i64, tpu.core_type = #tpu.core_type<tc>, window_params = [{transform_indices = @transform_0, window_bounds = array<i64: 2, 256>}, {pipeline_mode = #tpu.pipeline_mode<synchronous>, transform_indices = @transform_1, window_bounds = array<i64: 32, 2>}, {pipeline_mode = #tpu.pipeline_mode<synchronous>, transform_indices = @transform_2, window_bounds = array<i64: 3, 32, 32>}, {pipeline_mode = #tpu.pipeline_mode<synchronous>, transform_indices = @transform_3, window_bounds = array<i64: 1, 32>}, {pipeline_mode = #tpu.pipeline_mode<synchronous>, transform_indices = @transform_4, window_bounds = array<i64: 32, 5>}, {transform_indices = @transform_5, window_bounds = array<i64: 1, 256>}]} {
    %c0 = arith.constant 0 : index
    %c0_0 = arith.constant 0 : index
    %0 = vector.load %arg1[%c0, %c0_0] : memref<2x256xf32, #tpu.memory_space<vmem>>, vector<2x256xf32>
    %c0_1 = arith.constant 0 : index
    %c0_2 = arith.constant 0 : index
    %1 = vector.load %arg2[%c0_1, %c0_2] : memref<32x2xf32, #tpu.memory_space<vmem>>, vector<32x2xf32>
    %cst = arith.constant dense<0.000000e+00> : vector<32x256xf32>
    %2 = tpu.matmul %1, %0, %cst {dimension_numbers = #tpu.dot_dimension_numbers<[1], [0], [0], [1], [0, 0, 1, 1], [], []>} : vector<32x2xf32>, vector<2x256xf32>, vector<32x256xf32> -> vector<32x256xf32>
    %c0_3 = arith.constant 0 : index
    %c0_4 = arith.constant 0 : index
    %3 = vector.load %arg5[%c0_3, %c0_4] : memref<32x5xf32, #tpu.memory_space<vmem>>, vector<32x1xf32>
    %4 = vector.broadcast %3 : vector<32x1xf32> to vector<32x256xf32>
    %5 = arith.addf %2, %4 : vector<32x256xf32>
    %6 = math.tanh %5 : vector<32x256xf32>
    %c0_5 = arith.constant 0 : index
    %c0_6 = arith.constant 0 : index
    %c0_7 = arith.constant 0 : index
    %7 = vector.load %arg3[%c0_5, %c0_6, %c0_7] : memref<3x32x32xf32, #tpu.memory_space<vmem>>, vector<1x32x32xf32>
    %8 = vector.shape_cast %7 : vector<1x32x32xf32> to vector<32x32xf32>
    %cst_8 = arith.constant dense<0.000000e+00> : vector<32x256xf32>
    %9 = tpu.matmul %8, %6, %cst_8 {dimension_numbers = #tpu.dot_dimension_numbers<[1], [0], [0], [1], [0, 0, 1, 1], [], []>} : vector<32x32xf32>, vector<32x256xf32>, vector<32x256xf32> -> vector<32x256xf32>
    %c0_9 = arith.constant 0 : index
    %c1 = arith.constant 1 : index
    %10 = vector.load %arg5[%c0_9, %c1] : memref<32x5xf32, #tpu.memory_space<vmem>>, vector<32x1xf32>
    %11 = vector.broadcast %10 : vector<32x1xf32> to vector<32x256xf32>
    %12 = arith.addf %9, %11 : vector<32x256xf32>
    %13 = math.tanh %12 : vector<32x256xf32>
    %c1_10 = arith.constant 1 : index
    %c0_11 = arith.constant 0 : index
    %c0_12 = arith.constant 0 : index
    %14 = vector.load %arg3[%c1_10, %c0_11, %c0_12] : memref<3x32x32xf32, #tpu.memory_space<vmem>>, vector<1x32x32xf32>
    %15 = vector.shape_cast %14 : vector<1x32x32xf32> to vector<32x32xf32>
    %cst_13 = arith.constant dense<0.000000e+00> : vector<32x256xf32>
    %16 = tpu.matmul %15, %13, %cst_13 {dimension_numbers = #tpu.dot_dimension_numbers<[1], [0], [0], [1], [0, 0, 1, 1], [], []>} : vector<32x32xf32>, vector<32x256xf32>, vector<32x256xf32> -> vector<32x256xf32>
    %c0_14 = arith.constant 0 : index
    %c2 = arith.constant 2 : index
    %17 = vector.load %arg5[%c0_14, %c2] : memref<32x5xf32, #tpu.memory_space<vmem>>, vector<32x1xf32>
    %18 = vector.broadcast %17 : vector<32x1xf32> to vector<32x256xf32>
    %19 = arith.addf %16, %18 : vector<32x256xf32>
    %20 = math.tanh %19 : vector<32x256xf32>
    %c2_15 = arith.constant 2 : index
    %c0_16 = arith.constant 0 : index
    %c0_17 = arith.constant 0 : index
    %21 = vector.load %arg3[%c2_15, %c0_16, %c0_17] : memref<3x32x32xf32, #tpu.memory_space<vmem>>, vector<1x32x32xf32>
    %22 = vector.shape_cast %21 : vector<1x32x32xf32> to vector<32x32xf32>
    %cst_18 = arith.constant dense<0.000000e+00> : vector<32x256xf32>
    %23 = tpu.matmul %22, %20, %cst_18 {dimension_numbers = #tpu.dot_dimension_numbers<[1], [0], [0], [1], [0, 0, 1, 1], [], []>} : vector<32x32xf32>, vector<32x256xf32>, vector<32x256xf32> -> vector<32x256xf32>
    %c0_19 = arith.constant 0 : index
    %c3 = arith.constant 3 : index
    %24 = vector.load %arg5[%c0_19, %c3] : memref<32x5xf32, #tpu.memory_space<vmem>>, vector<32x1xf32>
    %25 = vector.broadcast %24 : vector<32x1xf32> to vector<32x256xf32>
    %26 = arith.addf %23, %25 : vector<32x256xf32>
    %27 = math.tanh %26 : vector<32x256xf32>
    %c0_20 = arith.constant 0 : index
    %c0_21 = arith.constant 0 : index
    %28 = vector.load %arg4[%c0_20, %c0_21] : memref<1x32xf32, #tpu.memory_space<vmem>>, vector<1x32xf32>
    %cst_22 = arith.constant dense<0.000000e+00> : vector<1x256xf32>
    %29 = tpu.matmul %28, %27, %cst_22 {dimension_numbers = #tpu.dot_dimension_numbers<[1], [0], [0], [1], [0, 0, 1, 1], [], []>} : vector<1x32xf32>, vector<32x256xf32>, vector<1x256xf32> -> vector<1x256xf32>
    %c0_23 = arith.constant 0 : index
    %c4 = arith.constant 4 : index
    %30 = vector.load %arg5[%c0_23, %c4] : memref<32x5xf32, #tpu.memory_space<vmem>>, vector<1x1xf32>
    %31 = vector.broadcast %30 : vector<1x1xf32> to vector<1x256xf32>
    %32 = arith.addf %29, %31 : vector<1x256xf32>
    %c0_24 = arith.constant 0 : index
    %c0_25 = arith.constant 0 : index
    %33 = vector.load %arg6[%c0_24, %c0_25] : memref<1x256xf32, #tpu.memory_space<vmem>>, vector<1x256xf32>
    tpu.vector_store %arg6[%c0_24, %c0_25], %32 {strides = array<i32>} : memref<1x256xf32, #tpu.memory_space<vmem>>, vector<1x256xf32>,
    return
  }
  func.func @transform_0(%arg0: i32) -> (i32, i32) {
    %c0_i32 = arith.constant 0 : i32
    %c0_i32_0 = arith.constant 0 : i32
    return %c0_i32, %arg0 : i32, i32
  }
  func.func @transform_1(%arg0: i32) -> (i32, i32) {
    %c0_i32 = arith.constant 0 : i32
    %c0_i32_0 = arith.constant 0 : i32
    %c0_i32_1 = arith.constant 0 : i32
    return %c0_i32, %c0_i32_0 : i32, i32
  }
  func.func @transform_2(%arg0: i32) -> (i32, i32, i32) {
    %c0_i32 = arith.constant 0 : i32
    %c0_i32_0 = arith.constant 0 : i32
    %c0_i32_1 = arith.constant 0 : i32
    %c0_i32_2 = arith.constant 0 : i32
    return %c0_i32, %c0_i32_0, %c0_i32_1 : i32, i32, i32
  }
  func.func @transform_3(%arg0: i32) -> (i32, i32) {
    %c0_i32 = arith.constant 0 : i32
    %c0_i32_0 = arith.constant 0 : i32
    %c0_i32_1 = arith.constant 0 : i32
    return %c0_i32, %c0_i32_0 : i32, i32
  }
  func.func @transform_4(%arg0: i32) -> (i32, i32) {
    %c0_i32 = arith.constant 0 : i32
    %c0_i32_0 = arith.constant 0 : i32
    %c0_i32_1 = arith.constant 0 : i32
    return %c0_i32, %c0_i32_0 : i32, i32
  }
  func.func @transform_5(%arg0: i32) -> (i32, i32) {
    %c0_i32 = arith.constant 0 : i32
    %c0_i32_0 = arith.constant 0 : i32
    return %c0_i32, %arg0 : i32, i32
  }
}

</mosaic_0001>

<llo_original>
// kernel: tpu_custom_call.1
$region0: #{tpu_custom_call.1}
  #allocation0 [shape = 'u32[]', space=smem, size = 0x4, offset = 0x4, fixed_abs, tag = 'smem constant byte address 0x4 - core index']
  #allocation1 [shape = 'u32[144,128]{1,0:T(1,128)}', space=vmem, size = 0x12000, scoped, tag = 'internal scratch']
  %s0 = inlined_call_operand.vmem [shape: f32[2,256], index: 0, kind: input, shape index: {}]
  %s1 = inlined_call_operand.vmem [shape: f32[32,2], index: 1, kind: input, shape index: {}]
  %s2 = inlined_call_operand.hbm [shape: f32[3,32,32], index: 2, kind: input, shape index: {}]
  %s3 = inlined_call_operand.vmem [shape: f32[1,32], index: 3, kind: input, shape index: {}]
  %s4 = inlined_call_operand.vmem [shape: f32[32,5], index: 4, kind: input, shape index: {}]
  %s5 = inlined_call_operand.hbm [shape: f32[1,256], index: 5, kind: output, shape index: {}]
  %s6 = sld [smem:[#allocation0]]
  $region34: #{tpu_custom_call.1} parent=0
    _
  %s8 = ssub.s32 1, %s6
  %s9 = scalar_select 0, %s8, %s6
  $region1: #{tpu_custom_call.1} parent=0
    #allocation2 [shape = 'u8[49152]{0}', space=vmem, size = 0xc000, scoped, tag = 'input window, operand 2, single buffered']
    #allocation3 [shape = 's32[1]{0}', space=sflag, size = 0x4, scoped, tag = 'scoped memory for tpu_custom_call.1']
    #allocation4 [shape = 's32[1]{0}', space=sflag, size = 0x4, scoped, tag = 'scoped memory for tpu_custom_call.1']
    #allocation5 [shape = 'u8[1024]{0}', space=vmem, size = 0x400, scoped, tag = 'output window, operand 0, single buffered']
    %10 = vsyncpa [#allocation3], 0
    %11 = vsyncpa [#allocation4], 0
    // Predicated region
    $region2: #{tpu_custom_call.1} parent=1 // pred_check
      _
    $region3: #{tpu_custom_call.1} parent=1 // pred_check_branch
      %13 = sbr.rel (0) target = $region5
    $region4: #{tpu_custom_call.1} parent=1 // pred_region
      _
    $region5: #{tpu_custom_call.1} parent=1 // pred_fallthru
      _
    // Predicated region
    $region6: #{tpu_custom_call.1} parent=1 // pred_check
      _
    $region7: #{tpu_custom_call.1} parent=1 // pred_check_branch
      %15 = sbr.rel (0) target = $region9
    $region8: #{tpu_custom_call.1} parent=1 // pred_region
      _
    $region9: #{tpu_custom_call.1} parent=1 // pred_fallthru
      _
    // Predicated region
    $region10: #{tpu_custom_call.1} parent=1 // pred_check
      _
    $region11: #{tpu_custom_call.1} parent=1 // pred_check_branch
      %17 = sbr.rel (0) target = $region13
    $region12: #{tpu_custom_call.1} parent=1 // pred_region
      %s19 = ssub.s32 1536, 1536
      %20 = vsyncadd [#allocation3], %s19
      %s21 = sshll.u32 [#allocation2], 4
      %s22 = int_to_ptr.vmem [resolvable:$true] %s21
      %27 = dma.hbm_to_vmem [thread:$0]  %s2, 1536, %s22, [#allocation3], 128, 128, 8
    $region13: #{tpu_custom_call.1} parent=1 // pred_fallthru
      _
    // Predicated region
    $region14: #{tpu_custom_call.1} parent=1 // pred_check
      _
    $region15: #{tpu_custom_call.1} parent=1 // pred_check_branch
      %29 = sbr.rel (0) target = $region17
    $region16: #{tpu_custom_call.1} parent=1 // pred_region
      _
    $region17: #{tpu_custom_call.1} parent=1 // pred_fallthru
      _
    // Predicated region
    $region18: #{tpu_custom_call.1} parent=1 // pred_check
      _
    $region19: #{tpu_custom_call.1} parent=1 // pred_check_branch
      %31 = sbr.rel (0) target = $region21
    $region20: #{tpu_custom_call.1} parent=1 // pred_region
      _
    $region21: #{tpu_custom_call.1} parent=1 // pred_fallthru
      _
    // Predicated region
    $region22: #{tpu_custom_call.1} parent=1 // pred_check
      _
    $region23: #{tpu_custom_call.1} parent=1 // pred_check_branch
      %33 = sbr.rel (0) target = $region25
    $region24: #{tpu_custom_call.1} parent=1 // pred_region
      %34 = dma.done [#allocation3], 1536
    $region25: #{tpu_custom_call.1} parent=1 // pred_fallthru
      _
    %v35 = vld [vmem:[%s0] sm:$0xf]
    %v36 = vld [vmem:[%s1] sm:$0xff]
    %v37 = vld [vmem:[%s1 + $0x8] sm:$0xff]
    %v38 = vld [vmem:[%s1 + $0x10] sm:$0xff]
    %v39 = vld [vmem:[%s1 + $0x18] sm:$0xff]
    %v40 = vld [vmem:[%s4] sm:$0xff]
    %v41 = vld [vmem:[%s4 + $0x8] sm:$0xff]
    %v42 = vld [vmem:[%s4 + $0x10] sm:$0xff]
    %v43 = vld [vmem:[%s4 + $0x18] sm:$0xff]
    %45 = vset.pattern.permute.xlu0 0
    %46 = vperm.xlu0 %45, %v40
    %v47 = vpop.permute.xlu0 %46
    %50 = vset.pattern.permute.xlu0 0
    %51 = vperm.xlu0 %50, %v41
    %v52 = vpop.permute.xlu0 %51
    %55 = vset.pattern.permute.xlu0 0
    %56 = vperm.xlu0 %55, %v42
    %v57 = vpop.permute.xlu0 %56
    %60 = vset.pattern.permute.xlu0 0
    %61 = vperm.xlu0 %60, %v43
    %v62 = vpop.permute.xlu0 %61
    %v66 = vunpack.c.l.s4 1983009808
    %v67 = vunpack.c.0.s8 %v66
    %v68 = vlaneseq
    %v69 = vshrl.u32 %v68, 7
    %v70 = vsub.s32 %v67, %v69
    %v71 = vrot.slane %v35, %v70
    %v72 = vcombine.high %v71, %v71
    %vm73 = vcmask 15360
    %v75 = vsel %vm73, %v36, 0
    %v78 = vsel %vm73, %v37, 0
    %v81 = vsel %vm73, %v38, 0
    %v84 = vsel %vm73, %v39, 0
    %vm86 = vcmask 1041408
    %v87 = vsel %vm86, %v71, 0
    %v89 = vsel %vm86, %v72, 0
    %91 = vmatprep.subr.mxu0 %v89
    %92 = vmatpush1.msra.mxu0 %v87
    %93 = vmatprep.subr.mxu0 0.0
    %94 = vmatpush1.msra.mxu0 0.0
    %95 = vmatprep.subr.mxu0 0.0
    %96 = vmatpush1.msra.mxu0 0.0
    %97 = vmatprep.subr.mxu0 0.0
    %98 = vmatpush1.msra.mxu0 0.0
    %99 = vmatprep.subr.mxu0 0.0
    %100 = vmatpush1.msra.mxu0 0.0
    %101 = vmatprep.subr.mxu0 0.0
    %102 = vmatpush1.msra.mxu0 0.0
    %103 = vmatprep.subr.mxu0 0.0
    %104 = vmatpush1.msra.mxu0 0.0
    %105 = vmatprep.subr.mxu0 0.0
    %106 = vmatpush1.msra.mxu0 0.0
    %107 = vmatprep.subr.mxu0 0.0
    %108 = vmatpush1.msra.mxu0 0.0
    %109 = vmatprep.subr.mxu0 0.0
    %110 = vmatpush1.msra.mxu0 0.0
    %111 = vmatprep.subr.mxu0 0.0
    %112 = vmatpush1.msra.mxu0 0.0
    %113 = vmatprep.subr.mxu0 0.0
    %114 = vmatpush1.msra.mxu0 0.0
    %115 = vmatprep.subr.mxu0 0.0
    %116 = vmatpush1.msra.mxu0 0.0
    %117 = vmatprep.subr.mxu0 0.0
    %118 = vmatpush1.msra.mxu0 0.0
    %119 = vmatprep.subr.mxu0 0.0
    %120 = vmatpush1.msra.mxu0 0.0
    %121 = vmatprep.subr.mxu0 0.0
    %122 = vmatpush1.msra.mxu0 0.0
    %123 = vmatprep.subr.mxu0 0.0
    %124 = vmatpush1.msra.mxu0 0.0
    %125 = vmatprep.subr.mxu0 0.0
    %126 = vmatpush1.msra.mxu0 0.0
    %127 = vmatprep.subr.mxu0 0.0
    %128 = vmatpush1.msra.mxu0 0.0
    %129 = vmatprep.subr.mxu0 0.0
    %130 = vmatpush1.msra.mxu0 0.0
    %131 = vmatprep.subr.mxu0 0.0
    %132 = vmatpush1.msra.mxu0 0.0
    %133 = vmatprep.subr.mxu0 0.0
    %134 = vmatpush1.msra.mxu0 0.0
    %135 = vmatprep.subr.mxu0 0.0
    %136 = vmatpush1.msra.mxu0 0.0
    %137 = vmatprep.subr.mxu0 0.0
    %138 = vmatpush1.msra.mxu0 0.0
    %139 = vmatprep.subr.mxu0 0.0
    %140 = vmatpush1.msra.mxu0 0.0
    %141 = vmatprep.subr.mxu0 0.0
    %142 = vmatpush1.msra.mxu0 0.0
    %143 = vmatprep.subr.mxu0 0.0
    %144 = vmatpush1.msra.mxu0 0.0
    %145 = vmatprep.subr.mxu0 0.0
    %146 = vmatpush1.msra.mxu0 0.0
    %147 = vmatprep.subr.mxu0 0.0
    %148 = vmatpush1.msra.mxu0 0.0
    %149 = vmatprep.subr.mxu0 0.0
    %150 = vmatpush1.msra.mxu0 0.0
    %151 = vmatprep.subr.mxu0 0.0
    %152 = vmatpush1.msra.mxu0 0.0
    %153 = vmatprep.subr.mxu0 0.0
    %154 = vmatpush1.msra.mxu0 0.0
    %155 = vmatprep.mubr.f32.mxu0 0.0
    %156 = vmatmul.mubr.f32.gmra.mrb[0].mxu0 %v75
    %v157 = vpop.f32.mrb[0].mxu0
    %v158 = vadd.f32 %v47, %v157
    %v159 = vpop.f32.mrb[0].mxu0
    %v160 = vadd.f32 %v47, %v159
    %161 = vmatprep.mubr.f32.mxu0 0.0
    %162 = vmatmul.mubr.f32.gmra.mrb[0].mxu0 %v78
    %v163 = vpop.f32.mrb[0].mxu0
    %v164 = vadd.f32 %v52, %v163
    %v165 = vpop.f32.mrb[0].mxu0
    %v166 = vadd.f32 %v52, %v165
    %167 = vmatprep.mubr.f32.mxu0 0.0
    %168 = vmatmul.mubr.f32.gmra.mrb[0].mxu0 %v81
    %v169 = vpop.f32.mrb[0].mxu0
    %v170 = vadd.f32 %v57, %v169
    %v171 = vpop.f32.mrb[0].mxu0
    %v172 = vadd.f32 %v57, %v171
    %173 = vmatprep.mubr.f32.mxu0 0.0
    %174 = vmatmul.mubr.f32.gmra.mrb[0].mxu0 %v84
    %v175 = vpop.f32.mrb[0].mxu0
    %v176 = vadd.f32 %v62, %v175
    %v177 = vpop.f32.mrb[0].mxu0
    %v178 = vadd.f32 %v62, %v177
    %179 = vdwg.mxu0
    %v180 = vtanh.pop %v158
    %v181 = vtanh.pop %v160
    %v182 = vtanh.pop %v164
    %v183 = vtanh.pop %v166
    %v184 = vtanh.pop %v170
    %v185 = vtanh.pop %v172
    %v186 = vtanh.pop %v176
    %v187 = vtanh.pop %v178
    %v188 = vld [vmem:[#allocation2] sm:$0xff]
    %v189 = vld [vmem:[#allocation2 + $0x8] sm:$0xff]
    %v190 = vld [vmem:[#allocation2 + $0x10] sm:$0xff]
    %v191 = vld [vmem:[#allocation2 + $0x18] sm:$0xff]
    %v192 = vld [vmem:[%s4] sm:$0xff]
    %v193 = vld [vmem:[%s4 + $0x8] sm:$0xff]
    %v194 = vld [vmem:[%s4 + $0x10] sm:$0xff]
    %v195 = vld [vmem:[%s4 + $0x18] sm:$0xff]
    %197 = vset.pattern.permute.xlu0 1
    %198 = vperm.xlu0 %197, %v192
    %v199 = vpop.permute.xlu0 %198
    %202 = vset.pattern.permute.xlu0 1
    %203 = vperm.xlu0 %202, %v193
    %v204 = vpop.permute.xlu0 %203
    %207 = vset.pattern.permute.xlu0 1
    %208 = vperm.xlu0 %207, %v194
    %v209 = vpop.permute.xlu0 %208
    %212 = vset.pattern.permute.xlu0 1
    %213 = vperm.xlu0 %212, %v195
    %v214 = vpop.permute.xlu0 %213
    %vm216 = vcmask 261120
    %v218 = vsel %vm216, %v188, 0
    %v221 = vsel %vm216, %v189, 0
    %v224 = vsel %vm216, %v190, 0
    %v227 = vsel %vm216, %v191, 0
    %229 = vmatprep.subr.mxu0 %v181
    %230 = vmatpush1.msra.mxu0 %v180
    %231 = vmatprep.subr.mxu0 %v183
    %232 = vmatpush1.msra.mxu0 %v182
    %233 = vmatprep.subr.mxu0 %v185
    %234 = vmatpush1.msra.mxu0 %v184
    %235 = vmatprep.subr.mxu0 %v187
    %236 = vmatpush1.msra.mxu0 %v186
    %237 = vmatprep.subr.mxu0 0.0
    %238 = vmatpush1.msra.mxu0 0.0
    %239 = vmatprep.subr.mxu0 0.0
    %240 = vmatpush1.msra.mxu0 0.0
    %241 = vmatprep.subr.mxu0 0.0
    %242 = vmatpush1.msra.mxu0 0.0
    %243 = vmatprep.subr.mxu0 0.0
    %244 = vmatpush1.msra.mxu0 0.0
    %245 = vmatprep.subr.mxu0 0.0
    %246 = vmatpush1.msra.mxu0 0.0
    %247 = vmatprep.subr.mxu0 0.0
    %248 = vmatpush1.msra.mxu0 0.0
    %249 = vmatprep.subr.mxu0 0.0
    %250 = vmatpush1.msra.mxu0 0.0
    %251 = vmatprep.subr.mxu0 0.0
    %252 = vmatpush1.msra.mxu0 0.0
    %253 = vmatprep.subr.mxu0 0.0
    %254 = vmatpush1.msra.mxu0 0.0
    %255 = vmatprep.subr.mxu0 0.0
    %256 = vmatpush1.msra.mxu0 0.0
    %257 = vmatprep.subr.mxu0 0.0
    %258 = vmatpush1.msra.mxu0 0.0
    %259 = vmatprep.subr.mxu0 0.0
    %260 = vmatpush1.msra.mxu0 0.0
    %261 = vmatprep.subr.mxu0 0.0
    %262 = vmatpush1.msra.mxu0 0.0
    %263 = vmatprep.subr.mxu0 0.0
    %264 = vmatpush1.msra.mxu0 0.0
    %265 = vmatprep.subr.mxu0 0.0
    %266 = vmatpush1.msra.mxu0 0.0
    %267 = vmatprep.subr.mxu0 0.0
    %268 = vmatpush1.msra.mxu0 0.0
    %269 = vmatprep.subr.mxu0 0.0
    %270 = vmatpush1.msra.mxu0 0.0
    %271 = vmatprep.subr.mxu0 0.0
    %272 = vmatpush1.msra.mxu0 0.0
    %273 = vmatprep.subr.mxu0 0.0
    %274 = vmatpush1.msra.mxu0 0.0
    %275 = vmatprep.subr.mxu0 0.0
    %276 = vmatpush1.msra.mxu0 0.0
    %277 = vmatprep.subr.mxu0 0.0
    %278 = vmatpush1.msra.mxu0 0.0
    %279 = vmatprep.subr.mxu0 0.0
    %280 = vmatpush1.msra.mxu0 0.0
    %281 = vmatprep.subr.mxu0 0.0
    %282 = vmatpush1.msra.mxu0 0.0
    %283 = vmatprep.subr.mxu0 0.0
    %284 = vmatpush1.msra.mxu0 0.0
    %285 = vmatprep.subr.mxu0 0.0
    %286 = vmatpush1.msra.mxu0 0.0
    %287 = vmatprep.subr.mxu0 0.0
    %288 = vmatpush1.msra.mxu0 0.0
    %289 = vmatprep.subr.mxu0 0.0
    %290 = vmatpush1.msra.mxu0 0.0
    %291 = vmatprep.subr.mxu0 0.0
    %292 = vmatpush1.msra.mxu0 0.0
    %293 = vmatprep.mubr.f32.mxu0 0.0
    %294 = vmatmul.mubr.f32.gmra.mrb[0].mxu0 %v218
    %v295 = vpop.f32.mrb[0].mxu0
    %v296 = vadd.f32 %v199, %v295
    %v297 = vpop.f32.mrb[0].mxu0
    %v298 = vadd.f32 %v199, %v297
    %299 = vmatprep.mubr.f32.mxu0 0.0
    %300 = vmatmul.mubr.f32.gmra.mrb[0].mxu0 %v221
    %v301 = vpop.f32.mrb[0].mxu0
    %v302 = vadd.f32 %v204, %v301
    %v303 = vpop.f32.mrb[0].mxu0
    %v304 = vadd.f32 %v204, %v303
    %305 = vmatprep.mubr.f32.mxu0 0.0
    %306 = vmatmul.mubr.f32.gmra.mrb[0].mxu0 %v224
    %v307 = vpop.f32.mrb[0].mxu0
    %v308 = vadd.f32 %v209, %v307
    %v309 = vpop.f32.mrb[0].mxu0
    %v310 = vadd.f32 %v209, %v309
    %311 = vmatprep.mubr.f32.mxu0 0.0
    %312 = vmatmul.mubr.f32.gmra.mrb[0].mxu0 %v227
    %v313 = vpop.f32.mrb[0].mxu0
    %v314 = vadd.f32 %v214, %v313
    %v315 = vpop.f32.mrb[0].mxu0
    %v316 = vadd.f32 %v214, %v315
    %317 = vdwg.mxu0
    %v318 = vtanh.pop %v296
    %v319 = vtanh.pop %v298
    %v320 = vtanh.pop %v302
    %v321 = vtanh.pop %v304
    %v322 = vtanh.pop %v308
    %v323 = vtanh.pop %v310
    %v324 = vtanh.pop %v314
    %v325 = vtanh.pop %v316
    %s326 = scalar_lea.vmem [#allocation2], 32
    %v327 = vld [vmem:[%s326] sm:$0xff]
    %v328 = vld [vmem:[%s326 + $0x8] sm:$0xff]
    %v329 = vld [vmem:[%s326 + $0x10] sm:$0xff]
    %v330 = vld [vmem:[%s326 + $0x18] sm:$0xff]
    %331 = vset.pattern.permute.xlu0 2
    %332 = vperm.xlu0 %331, %v192
    %v333 = vpop.permute.xlu0 %332
    %335 = vset.pattern.permute.xlu0 2
    %336 = vperm.xlu0 %335, %v193
    %v337 = vpop.permute.xlu0 %336
    %339 = vset.pattern.permute.xlu0 2
    %340 = vperm.xlu0 %339, %v194
    %v341 = vpop.permute.xlu0 %340
    %343 = vset.pattern.permute.xlu0 2
    %344 = vperm.xlu0 %343, %v195
    %v345 = vpop.permute.xlu0 %344
    %v348 = vsel %vm216, %v327, 0
    %v351 = vsel %vm216, %v328, 0
    %v354 = vsel %vm216, %v329, 0
    %v357 = vsel %vm216, %v330, 0
    %359 = vmatprep.subr.mxu0 %v319
    %360 = vmatpush1.msra.mxu0 %v318
    %361 = vmatprep.subr.mxu0 %v321
    %362 = vmatpush1.msra.mxu0 %v320
    %363 = vmatprep.subr.mxu0 %v323
    %364 = vmatpush1.msra.mxu0 %v322
    %365 = vmatprep.subr.mxu0 %v325
    %366 = vmatpush1.msra.mxu0 %v324
    %367 = vmatprep.subr.mxu0 0.0
    %368 = vmatpush1.msra.mxu0 0.0
    %369 = vmatprep.subr.mxu0 0.0
    %370 = vmatpush1.msra.mxu0 0.0
    %371 = vmatprep.subr.mxu0 0.0
    %372 = vmatpush1.msra.mxu0 0.0
    %373 = vmatprep.subr.mxu0 0.0
    %374 = vmatpush1.msra.mxu0 0.0
    %375 = vmatprep.subr.mxu0 0.0
    %376 = vmatpush1.msra.mxu0 0.0
    %377 = vmatprep.subr.mxu0 0.0
    %378 = vmatpush1.msra.mxu0 0.0
    %379 = vmatprep.subr.mxu0 0.0
    %380 = vmatpush1.msra.mxu0 0.0
    %381 = vmatprep.subr.mxu0 0.0
    %382 = vmatpush1.msra.mxu0 0.0
    %383 = vmatprep.subr.mxu0 0.0
    %384 = vmatpush1.msra.mxu0 0.0
    %385 = vmatprep.subr.mxu0 0.0
    %386 = vmatpush1.msra.mxu0 0.0
    %387 = vmatprep.subr.mxu0 0.0
    %388 = vmatpush1.msra.mxu0 0.0
    %389 = vmatprep.subr.mxu0 0.0
    %390 = vmatpush1.msra.mxu0 0.0
    %391 = vmatprep.subr.mxu0 0.0
    %392 = vmatpush1.msra.mxu0 0.0
    %393 = vmatprep.subr.mxu0 0.0
    %394 = vmatpush1.msra.mxu0 0.0
    %395 = vmatprep.subr.mxu0 0.0
    %396 = vmatpush1.msra.mxu0 0.0
    %397 = vmatprep.subr.mxu0 0.0
    %398 = vmatpush1.msra.mxu0 0.0
    %399 = vmatprep.subr.mxu0 0.0
    %400 = vmatpush1.msra.mxu0 0.0
    %401 = vmatprep.subr.mxu0 0.0
    %402 = vmatpush1.msra.mxu0 0.0
    %403 = vmatprep.subr.mxu0 0.0
    %404 = vmatpush1.msra.mxu0 0.0
    %405 = vmatprep.subr.mxu0 0.0
    %406 = vmatpush1.msra.mxu0 0.0
    %407 = vmatprep.subr.mxu0 0.0
    %408 = vmatpush1.msra.mxu0 0.0
    %409 = vmatprep.subr.mxu0 0.0
    %410 = vmatpush1.msra.mxu0 0.0
    %411 = vmatprep.subr.mxu0 0.0
    %412 = vmatpush1.msra.mxu0 0.0
    %413 = vmatprep.subr.mxu0 0.0
    %414 = vmatpush1.msra.mxu0 0.0
    %415 = vmatprep.subr.mxu0 0.0
    %416 = vmatpush1.msra.mxu0 0.0
    %417 = vmatprep.subr.mxu0 0.0
    %418 = vmatpush1.msra.mxu0 0.0
    %419 = vmatprep.subr.mxu0 0.0
    %420 = vmatpush1.msra.mxu0 0.0
    %421 = vmatprep.subr.mxu0 0.0
    %422 = vmatpush1.msra.mxu0 0.0
    %423 = vmatprep.mubr.f32.mxu0 0.0
    %424 = vmatmul.mubr.f32.gmra.mrb[0].mxu0 %v348
    %v425 = vpop.f32.mrb[0].mxu0
    %v426 = vadd.f32 %v333, %v425
    %v427 = vpop.f32.mrb[0].mxu0
    %v428 = vadd.f32 %v333, %v427
    %429 = vmatprep.mubr.f32.mxu0 0.0
    %430 = vmatmul.mubr.f32.gmra.mrb[0].mxu0 %v351
    %v431 = vpop.f32.mrb[0].mxu0
    %v432 = vadd.f32 %v337, %v431
    %v433 = vpop.f32.mrb[0].mxu0
    %v434 = vadd.f32 %v337, %v433
    %435 = vmatprep.mubr.f32.mxu0 0.0
    %436 = vmatmul.mubr.f32.gmra.mrb[0].mxu0 %v354
    %v437 = vpop.f32.mrb[0].mxu0
    %v438 = vadd.f32 %v341, %v437
    %v439 = vpop.f32.mrb[0].mxu0
    %v440 = vadd.f32 %v341, %v439
    %441 = vmatprep.mubr.f32.mxu0 0.0
    %442 = vmatmul.mubr.f32.gmra.mrb[0].mxu0 %v357
    %v443 = vpop.f32.mrb[0].mxu0
    %v444 = vadd.f32 %v345, %v443
    %v445 = vpop.f32.mrb[0].mxu0
    %v446 = vadd.f32 %v345, %v445
    %447 = vdwg.mxu0
    %v448 = vtanh.pop %v426
    %v449 = vtanh.pop %v428
    %v450 = vtanh.pop %v432
    %v451 = vtanh.pop %v434
    %v452 = vtanh.pop %v438
    %v453 = vtanh.pop %v440
    %v454 = vtanh.pop %v444
    %v455 = vtanh.pop %v446
    %s456 = scalar_lea.vmem [#allocation2], 64
    %v457 = vld [vmem:[%s456] sm:$0xff]
    %v458 = vld [vmem:[%s456 + $0x8] sm:$0xff]
    %v459 = vld [vmem:[%s456 + $0x10] sm:$0xff]
    %v460 = vld [vmem:[%s456 + $0x18] sm:$0xff]
    %461 = vset.pattern.permute.xlu0 3
    %462 = vperm.xlu0 %461, %v192
    %v463 = vpop.permute.xlu0 %462
    %465 = vset.pattern.permute.xlu0 3
    %466 = vperm.xlu0 %465, %v193
    %v467 = vpop.permute.xlu0 %466
    %469 = vset.pattern.permute.xlu0 3
    %470 = vperm.xlu0 %469, %v194
    %v471 = vpop.permute.xlu0 %470
    %473 = vset.pattern.permute.xlu0 3
    %474 = vperm.xlu0 %473, %v195
    %v475 = vpop.permute.xlu0 %474
    %v478 = vsel %vm216, %v457, 0
    %v481 = vsel %vm216, %v458, 0
    %v484 = vsel %vm216, %v459, 0
    %v487 = vsel %vm216, %v460, 0
    %489 = vmatprep.subr.mxu0 %v449
    %490 = vmatpush1.msra.mxu0 %v448
    %491 = vmatprep.subr.mxu0 %v451
    %492 = vmatpush1.msra.mxu0 %v450
    %493 = vmatprep.subr.mxu0 %v453
    %494 = vmatpush1.msra.mxu0 %v452
    %495 = vmatprep.subr.mxu0 %v455
    %496 = vmatpush1.msra.mxu0 %v454
    %497 = vmatprep.subr.mxu0 0.0
    %498 = vmatpush1.msra.mxu0 0.0
    %499 = vmatprep.subr.mxu0 0.0
    %500 = vmatpush1.msra.mxu0 0.0
    %501 = vmatprep.subr.mxu0 0.0
    %502 = vmatpush1.msra.mxu0 0.0
    %503 = vmatprep.subr.mxu0 0.0
    %504 = vmatpush1.msra.mxu0 0.0
    %505 = vmatprep.subr.mxu0 0.0
    %506 = vmatpush1.msra.mxu0 0.0
    %507 = vmatprep.subr.mxu0 0.0
    %508 = vmatpush1.msra.mxu0 0.0
    %509 = vmatprep.subr.mxu0 0.0
    %510 = vmatpush1.msra.mxu0 0.0
    %511 = vmatprep.subr.mxu0 0.0
    %512 = vmatpush1.msra.mxu0 0.0
    %513 = vmatprep.subr.mxu0 0.0
    %514 = vmatpush1.msra.mxu0 0.0
    %515 = vmatprep.subr.mxu0 0.0
    %516 = vmatpush1.msra.mxu0 0.0
    %517 = vmatprep.subr.mxu0 0.0
    %518 = vmatpush1.msra.mxu0 0.0
    %519 = vmatprep.subr.mxu0 0.0
    %520 = vmatpush1.msra.mxu0 0.0
    %521 = vmatprep.subr.mxu0 0.0
    %522 = vmatpush1.msra.mxu0 0.0
    %523 = vmatprep.subr.mxu0 0.0
    %524 = vmatpush1.msra.mxu0 0.0
    %525 = vmatprep.subr.mxu0 0.0
    %526 = vmatpush1.msra.mxu0 0.0
    %527 = vmatprep.subr.mxu0 0.0
    %528 = vmatpush1.msra.mxu0 0.0
    %529 = vmatprep.subr.mxu0 0.0
    %530 = vmatpush1.msra.mxu0 0.0
    %531 = vmatprep.subr.mxu0 0.0
    %532 = vmatpush1.msra.mxu0 0.0
    %533 = vmatprep.subr.mxu0 0.0
    %534 = vmatpush1.msra.mxu0 0.0
    %535 = vmatprep.subr.mxu0 0.0
    %536 = vmatpush1.msra.mxu0 0.0
    %537 = vmatprep.subr.mxu0 0.0
    %538 = vmatpush1.msra.mxu0 0.0
    %539 = vmatprep.subr.mxu0 0.0
    %540 = vmatpush1.msra.mxu0 0.0
    %541 = vmatprep.subr.mxu0 0.0
    %542 = vmatpush1.msra.mxu0 0.0
    %543 = vmatprep.subr.mxu0 0.0
    %544 = vmatpush1.msra.mxu0 0.0
    %545 = vmatprep.subr.mxu0 0.0
    %546 = vmatpush1.msra.mxu0 0.0
    %547 = vmatprep.subr.mxu0 0.0
    %548 = vmatpush1.msra.mxu0 0.0
    %549 = vmatprep.subr.mxu0 0.0
    %550 = vmatpush1.msra.mxu0 0.0
    %551 = vmatprep.subr.mxu0 0.0
    %552 = vmatpush1.msra.mxu0 0.0
    %553 = vmatprep.mubr.f32.mxu0 0.0
    %554 = vmatmul.mubr.f32.gmra.mrb[0].mxu0 %v478
    %v555 = vpop.f32.mrb[0].mxu0
    %v556 = vadd.f32 %v463, %v555
    %v557 = vpop.f32.mrb[0].mxu0
    %v558 = vadd.f32 %v463, %v557
    %559 = vmatprep.mubr.f32.mxu0 0.0
    %560 = vmatmul.mubr.f32.gmra.mrb[0].mxu0 %v481
    %v561 = vpop.f32.mrb[0].mxu0
    %v562 = vadd.f32 %v467, %v561
    %v563 = vpop.f32.mrb[0].mxu0
    %v564 = vadd.f32 %v467, %v563
    %565 = vmatprep.mubr.f32.mxu0 0.0
    %566 = vmatmul.mubr.f32.gmra.mrb[0].mxu0 %v484
    %v567 = vpop.f32.mrb[0].mxu0
    %v568 = vadd.f32 %v471, %v567
    %v569 = vpop.f32.mrb[0].mxu0
    %v570 = vadd.f32 %v471, %v569
    %571 = vmatprep.mubr.f32.mxu0 0.0
    %572 = vmatmul.mubr.f32.gmra.mrb[0].mxu0 %v487
    %v573 = vpop.f32.mrb[0].mxu0
    %v574 = vadd.f32 %v475, %v573
    %v575 = vpop.f32.mrb[0].mxu0
    %v576 = vadd.f32 %v475, %v575
    %577 = vdwg.mxu0
    %v578 = vtanh.pop %v556
    %v579 = vtanh.pop %v558
    %v580 = vtanh.pop %v562
    %v581 = vtanh.pop %v564
    %v582 = vtanh.pop %v568
    %v583 = vtanh.pop %v570
    %v584 = vtanh.pop %v574
    %v585 = vtanh.pop %v576
    %v586 = vld [vmem:[%s3] sm:$0x1]
    %v587 = vld [vmem:[%s4] sm:$0x1]
    %589 = vset.pattern.permute.xlu0 4
    %590 = vperm.xlu0 %589, %v587
    %v591 = vpop.permute.xlu0 %590
    %v594 = vsel %vm216, %v586, 0
    %596 = vmatprep.subr.mxu0 %v579
    %597 = vmatpush1.msra.mxu0 %v578
    %598 = vmatprep.subr.mxu0 %v581
    %599 = vmatpush1.msra.mxu0 %v580
    %600 = vmatprep.subr.mxu0 %v583
    %601 = vmatpush1.msra.mxu0 %v582
    %602 = vmatprep.subr.mxu0 %v585
    %603 = vmatpush1.msra.mxu0 %v584
    %604 = vmatprep.subr.mxu0 0.0
    %605 = vmatpush1.msra.mxu0 0.0
    %606 = vmatprep.subr.mxu0 0.0
    %607 = vmatpush1.msra.mxu0 0.0
    %608 = vmatprep.subr.mxu0 0.0
    %609 = vmatpush1.msra.mxu0 0.0
    %610 = vmatprep.subr.mxu0 0.0
    %611 = vmatpush1.msra.mxu0 0.0
    %612 = vmatprep.subr.mxu0 0.0
    %613 = vmatpush1.msra.mxu0 0.0
    %614 = vmatprep.subr.mxu0 0.0
    %615 = vmatpush1.msra.mxu0 0.0
    %616 = vmatprep.subr.mxu0 0.0
    %617 = vmatpush1.msra.mxu0 0.0
    %618 = vmatprep.subr.mxu0 0.0
    %619 = vmatpush1.msra.mxu0 0.0
    %620 = vmatprep.subr.mxu0 0.0
    %621 = vmatpush1.msra.mxu0 0.0
    %622 = vmatprep.subr.mxu0 0.0
    %623 = vmatpush1.msra.mxu0 0.0
    %624 = vmatprep.subr.mxu0 0.0
    %625 = vmatpush1.msra.mxu0 0.0
    %626 = vmatprep.subr.mxu0 0.0
    %627 = vmatpush1.msra.mxu0 0.0
    %628 = vmatprep.subr.mxu0 0.0
    %629 = vmatpush1.msra.mxu0 0.0
    %630 = vmatprep.subr.mxu0 0.0
    %631 = vmatpush1.msra.mxu0 0.0
    %632 = vmatprep.subr.mxu0 0.0
    %633 = vmatpush1.msra.mxu0 0.0
    %634 = vmatprep.subr.mxu0 0.0
    %635 = vmatpush1.msra.mxu0 0.0
    %636 = vmatprep.subr.mxu0 0.0
    %637 = vmatpush1.msra.mxu0 0.0
    %638 = vmatprep.subr.mxu0 0.0
    %639 = vmatpush1.msra.mxu0 0.0
    %640 = vmatprep.subr.mxu0 0.0
    %641 = vmatpush1.msra.mxu0 0.0
    %642 = vmatprep.subr.mxu0 0.0
    %643 = vmatpush1.msra.mxu0 0.0
    %644 = vmatprep.subr.mxu0 0.0
    %645 = vmatpush1.msra.mxu0 0.0
    %646 = vmatprep.subr.mxu0 0.0
    %647 = vmatpush1.msra.mxu0 0.0
    %648 = vmatprep.subr.mxu0 0.0
    %649 = vmatpush1.msra.mxu0 0.0
    %650 = vmatprep.subr.mxu0 0.0
    %651 = vmatpush1.msra.mxu0 0.0
    %652 = vmatprep.subr.mxu0 0.0
    %653 = vmatpush1.msra.mxu0 0.0
    %654 = vmatprep.subr.mxu0 0.0
    %655 = vmatpush1.msra.mxu0 0.0
    %656 = vmatprep.subr.mxu0 0.0
    %657 = vmatpush1.msra.mxu0 0.0
    %658 = vmatprep.subr.mxu0 0.0
    %659 = vmatpush1.msra.mxu0 0.0
    %660 = vmatprep.mubr.f32.mxu0 0.0
    %661 = vmatmul.mubr.f32.gmra.mrb[0].mxu0 %v594
    %v662 = vpop.f32.mrb[0].mxu0
    %v663 = vadd.f32 %v591, %v662
    %v664 = vpop.f32.mrb[0].mxu0
    %v665 = vadd.f32 %v591, %v664
    %666 = vdwg.mxu0
    %v669 = vcombine.low %v663, %v665
    %v671 = vunpack.c.l.s4 1966171168
    %v672 = vunpack.c.0.s8 %v671
    %v673 = vlaneseq
    %v674 = vshrl.u32 %v673, 7
    %v675 = vsub.s32 %v672, %v674
    %v676 = vrot.slane %v669, %v675
    %v678 = vunpack.c.l.s4 1966171168
    %v679 = vunpack.c.0.s8 %v678
    %v680 = vlaneseq
    %v681 = vshrl.u32 %v680, 7
    %v682 = vsub.s32 %v679, %v681
    %v683 = vrot.slane %v676, %v682
    %v685 = vlaneseq
    %vm686 = vcmp.ge.s32.totalorder %v685, 0
    %vm687 = vcmp.lt.s32.totalorder %v685, 256
    %vm688 = vmand %vm686, %vm687
    %689 = vst.msk [vmem:[#allocation5] sm:$0x3] %vm688, %v683
    // Predicated region
    $region26: #{tpu_custom_call.1} parent=1 // pred_check
      _
    $region27: #{tpu_custom_call.1} parent=1 // pred_check_branch
      %691 = sbr.rel (0) target = $region29
    $region28: #{tpu_custom_call.1} parent=1 // pred_region
      %s693 = ssub.s32 32, 32
      %694 = vsyncadd [#allocation4], %s693
      %s696 = sshll.u32 [#allocation5], 4
      %s697 = int_to_ptr.vmem [resolvable:$true] %s696
      %699 = dma.vmem_to_hbm [thread:$0]  %s697, 32, %s5, [#allocation4]
    $region29: #{tpu_custom_call.1} parent=1 // pred_fallthru
      _
    // Predicated region
    $region30: #{tpu_custom_call.1} parent=1 // pred_check
      _
    $region31: #{tpu_custom_call.1} parent=1 // pred_check_branch
      %701 = sbr.rel (0) target = $region33
    $region32: #{tpu_custom_call.1} parent=1 // pred_region
      %702 = dma.done [#allocation4], 32
    $region33: #{tpu_custom_call.1} parent=1 // pred_fallthru
      _
    %703 = vsyncpa [#allocation3], 1
    %704 = vsyncpa [#allocation4], 1

</llo_original>
